<compile_context>
chip_gen: v7x
topology: tpu7x:2x2x1
jax: 0.10.0
libtpu: 0.0.40
codegen_flags: <defaults>
</compile_context>

<pallas_src>
import jax
import jax.numpy as jnp
from jax.experimental import pallas as pl
from jax.experimental.pallas import tpu as pltpu

# ImageNet normalization constants from the module's __init__
_MEAN = (0.485, 0.456, 0.406)
_STD = (0.229, 0.224, 0.225)


def _normalize_kernel(scale_ref, bias_ref, x_ref, o_ref):
    # scale_ref/bias_ref: SMEM, shape (C,), float32
    # x_ref/o_ref:        VMEM tile, shape (1, C, H*W)
    num_c = x_ref.shape[1]
    for ch in range(num_c):  # C is tiny (3); static unrolled loop, scalar reads are free
        s = scale_ref[ch]
        b = bias_ref[ch]
        xc = x_ref[:, ch : ch + 1, :].astype(jnp.float32)  # (1, 1, H*W), lane-dense
        o_ref[:, ch : ch + 1, :] = (xc * s + b).astype(o_ref.dtype)


def normalize(x: jax.Array) -> jax.Array:
    """x: (N, C, H, W) float array, C must equal 3 (like the PyTorch module)."""
    n, c, h, w = x.shape
    assert c == len(_MEAN), "Normalize expects 3 channels (ImageNet RGB)."
    hw = h * w

    # Fold (x - mean) / std  ->  x * scale + bias, with constants kept in f32
    # (don't quantize the constants to bf16 if x is bf16).
    scale = jnp.asarray([1.0 / s for s in _STD], dtype=jnp.float32)
    bias = jnp.asarray([-m / s for m, s in zip(_MEAN, _STD)], dtype=jnp.float32)

    # Layout-only reshape so the last (lane) dim is H*W.
    x_flat = x.reshape(n, c, hw)

    out_flat = pl.pallas_call(
        _normalize_kernel,
        out_shape=jax.ShapeDtypeStruct((n, c, hw), x.dtype),
        grid=(n,),
        in_specs=[
            pl.BlockSpec(memory_space=pltpu.MemorySpace.SMEM),  # scale (C,) f32
            pl.BlockSpec(memory_space=pltpu.MemorySpace.SMEM),  # bias  (C,) f32
            pl.BlockSpec((1, c, hw), lambda i: (i, 0, 0)),       # one batch slab per step
        ],
        out_specs=pl.BlockSpec((1, c, hw), lambda i: (i, 0, 0)),
        compiler_params=pltpu.CompilerParams(
            dimension_semantics=("parallel",)  # N axis feeds both TCs on v7x
        ),
    )(scale, bias, x_flat)

    return out_flat.reshape(n, c, h, w)


if __name__ == "__main__":
    key = jax.random.PRNGKey(0)
    # NCHW like PyTorch: small batch, 3 channels (fixed by the module), 16x16 spatial
    # (H*W = 256, an exact multiple of 128 -> fully unmasked stores).
    x = jax.random.uniform(key, (2, 3, 16, 16), dtype=jnp.float32)

    out = normalize(x)
    jax.block_until_ready(out)

    # reference check in plain JAX (exact divide); scale/bias folding differs by ~1 ulp
    mean = jnp.asarray(_MEAN, dtype=jnp.float32).reshape(1, 3, 1, 1)
    std = jnp.asarray(_STD, dtype=jnp.float32).reshape(1, 3, 1, 1)
    ref = (x - mean) / std
    assert jnp.allclose(out, ref, atol=1e-5), "mismatch vs reference"

    print("KERNEL_OK")
</pallas_src>

<mosaic_0001>
module attributes {stable_mosaic.version = 11 : i64} {
  func.func @_normalize_kernel(%arg0: i32, %arg1: memref<3xf32, #tpu.memory_space<smem>>, %arg2: memref<3xf32, #tpu.memory_space<smem>>, %arg3: memref<1x3x256xf32, #tpu.memory_space<vmem>>, %arg4: memref<1x3x256xf32, #tpu.memory_space<vmem>>) attributes {dimension_semantics = [#tpu.dimension_semantics<parallel>], iteration_bounds = array<i64: 2>, scalar_prefetch = 0 : i64, scratch_operands = 0 : i64, tpu.core_type = #tpu.core_type<tc>, window_params = [{transform_indices = @transform_0, window_bounds = array<i64: 3>}, {transform_indices = @transform_1, window_bounds = array<i64: 3>}, {transform_indices = @transform_2, window_bounds = array<i64: 1, 3, 256>}, {transform_indices = @transform_3, window_bounds = array<i64: 1, 3, 256>}]} {
    %c0 = arith.constant 0 : index
    %0 = memref.load %arg1[%c0] : memref<3xf32, #tpu.memory_space<smem>>
    %c0_0 = arith.constant 0 : index
    %1 = memref.load %arg2[%c0_0] : memref<3xf32, #tpu.memory_space<smem>>
    %c0_1 = arith.constant 0 : index
    %c0_2 = arith.constant 0 : index
    %c0_3 = arith.constant 0 : index
    %2 = vector.load %arg3[%c0_1, %c0_2, %c0_3] : memref<1x3x256xf32, #tpu.memory_space<vmem>>, vector<1x1x256xf32>
    %3 = vector.broadcast %0 : f32 to vector<1x1x256xf32>
    %4 = arith.mulf %2, %3 : vector<1x1x256xf32>
    %5 = vector.broadcast %1 : f32 to vector<1x1x256xf32>
    %6 = arith.addf %4, %5 : vector<1x1x256xf32>
    %c0_4 = arith.constant 0 : index
    %c0_5 = arith.constant 0 : index
    %c0_6 = arith.constant 0 : index
    %7 = vector.load %arg4[%c0_4, %c0_5, %c0_6] : memref<1x3x256xf32, #tpu.memory_space<vmem>>, vector<1x1x256xf32>
    tpu.vector_store %arg4[%c0_4, %c0_5, %c0_6], %6 {strides = array<i32>} : memref<1x3x256xf32, #tpu.memory_space<vmem>>, vector<1x1x256xf32>,
    %c1 = arith.constant 1 : index
    %8 = memref.load %arg1[%c1] : memref<3xf32, #tpu.memory_space<smem>>
    %c1_7 = arith.constant 1 : index
    %9 = memref.load %arg2[%c1_7] : memref<3xf32, #tpu.memory_space<smem>>
    %c0_8 = arith.constant 0 : index
    %c1_9 = arith.constant 1 : index
    %c0_10 = arith.constant 0 : index
    %10 = vector.load %arg3[%c0_8, %c1_9, %c0_10] : memref<1x3x256xf32, #tpu.memory_space<vmem>>, vector<1x1x256xf32>
    %11 = vector.broadcast %8 : f32 to vector<1x1x256xf32>
    %12 = arith.mulf %10, %11 : vector<1x1x256xf32>
    %13 = vector.broadcast %9 : f32 to vector<1x1x256xf32>
    %14 = arith.addf %12, %13 : vector<1x1x256xf32>
    %c0_11 = arith.constant 0 : index
    %c1_12 = arith.constant 1 : index
    %c0_13 = arith.constant 0 : index
    %15 = vector.load %arg4[%c0_11, %c1_12, %c0_13] : memref<1x3x256xf32, #tpu.memory_space<vmem>>, vector<1x1x256xf32>
    tpu.vector_store %arg4[%c0_11, %c1_12, %c0_13], %14 {strides = array<i32>} : memref<1x3x256xf32, #tpu.memory_space<vmem>>, vector<1x1x256xf32>,
    %c2 = arith.constant 2 : index
    %16 = memref.load %arg1[%c2] : memref<3xf32, #tpu.memory_space<smem>>
    %c2_14 = arith.constant 2 : index
    %17 = memref.load %arg2[%c2_14] : memref<3xf32, #tpu.memory_space<smem>>
    %c0_15 = arith.constant 0 : index
    %c2_16 = arith.constant 2 : index
    %c0_17 = arith.constant 0 : index
    %18 = vector.load %arg3[%c0_15, %c2_16, %c0_17] : memref<1x3x256xf32, #tpu.memory_space<vmem>>, vector<1x1x256xf32>
    %19 = vector.broadcast %16 : f32 to vector<1x1x256xf32>
    %20 = arith.mulf %18, %19 : vector<1x1x256xf32>
    %21 = vector.broadcast %17 : f32 to vector<1x1x256xf32>
    %22 = arith.addf %20, %21 : vector<1x1x256xf32>
    %c0_18 = arith.constant 0 : index
    %c2_19 = arith.constant 2 : index
    %c0_20 = arith.constant 0 : index
    %23 = vector.load %arg4[%c0_18, %c2_19, %c0_20] : memref<1x3x256xf32, #tpu.memory_space<vmem>>, vector<1x1x256xf32>
    tpu.vector_store %arg4[%c0_18, %c2_19, %c0_20], %22 {strides = array<i32>} : memref<1x3x256xf32, #tpu.memory_space<vmem>>, vector<1x1x256xf32>,
    return
  }
  func.func @transform_0(%arg0: i32) -> i32 {
    %c0_i32 = arith.constant 0 : i32
    %c0_i32_0 = arith.constant 0 : i32
    return %c0_i32 : i32
  }
  func.func @transform_1(%arg0: i32) -> i32 {
    %c0_i32 = arith.constant 0 : i32
    %c0_i32_0 = arith.constant 0 : i32
    return %c0_i32 : i32
  }
  func.func @transform_2(%arg0: i32) -> (i32, i32, i32) {
    %c0_i32 = arith.constant 0 : i32
    %c0_i32_0 = arith.constant 0 : i32
    %c0_i32_1 = arith.constant 0 : i32
    return %arg0, %c0_i32, %c0_i32_0 : i32, i32, i32
  }
  func.func @transform_3(%arg0: i32) -> (i32, i32, i32) {
    %c0_i32 = arith.constant 0 : i32
    %c0_i32_0 = arith.constant 0 : i32
    %c0_i32_1 = arith.constant 0 : i32
    return %arg0, %c0_i32, %c0_i32_0 : i32, i32, i32
  }
}

</mosaic_0001>

<llo_original>
// kernel: tpu_custom_call.1
$region0: #{tpu_custom_call.1}
  #allocation0 [shape = 'u32[]', space=smem, size = 0x4, offset = 0x4, fixed_abs, tag = 'smem constant byte address 0x4 - core index']
  #allocation1 [shape = 'u32[144,128]{1,0:T(1,128)}', space=vmem, size = 0x12000, scoped, tag = 'internal scratch']
  %s0 = inlined_call_operand.vmem [shape: f32[3], index: 0, kind: input, shape index: {}]
  %s1 = inlined_call_operand.vmem [shape: f32[3], index: 1, kind: input, shape index: {}]
  %s2 = inlined_call_operand.vmem [shape: f32[2,3,256], index: 2, kind: input, shape index: {}]
  %s3 = inlined_call_operand.vmem [shape: f32[2,3,256], index: 3, kind: output, shape index: {}]
  %s4 = sld [smem:[#allocation0]]
  $region53: #{tpu_custom_call.1} parent=0
    _
  %s6 = ssub.s32 1, %s4
  %s7 = scalar_select 0, %s6, %s4
  $region1: #{tpu_custom_call.1} parent=0
    #allocation2 [shape = 'u8[512]{0}', space=smem, size = 0x200, scoped, tag = 'input window, operand 0, single buffered']
    #allocation3 [shape = 's32[2]{0}', space=sflag, size = 0x8, scoped, tag = 'scoped memory for tpu_custom_call.1']
    #allocation4 [shape = 'u8[512]{0}', space=smem, size = 0x200, scoped, tag = 'input window, operand 1, single buffered']
    #allocation5 [shape = 's32[1]{0}', space=sflag, size = 0x4, scoped, tag = 'scoped memory for tpu_custom_call.1']
    %8 = vsyncpa [#allocation3], 0
    %9 = vsyncpa [#allocation5], 0
    loop: start=0, step=1, limit=4
    $region2: #{tpu_custom_call.1} parent=1 // loop_pre_header
      _
    $region3: #{tpu_custom_call.1} parent=1 // loop_header
      %s11 = sphi 0, %s15
      %p12 = scmp.ge.s32.totalorder %s11, 4
      %s19 = sphi 0, %s19
      %s21 = sphi 0, %s19
      %s22 = sphi 0, %s21
      %s36 = sphi 0, %s22
      %s40 = sphi 0, %s40
      %s42 = sphi 0, %s40
      %s43 = sphi 0, %s42
      %s57 = sphi 0, %s43
      %s63 = sphi 0, %s65
      %s66 = sphi 0, %s63
      %s67 = sphi 0, %s66
      %s83 = sphi 0, %s67
      %s89 = sphi 0, %s91
      %s92 = sphi 0, %s89
      %s93 = sphi 0, %s92
      %s109 = sphi 0, %s93
    $region4: #{tpu_custom_call.1} parent=1 // loop_header_branch
      %14 = sbr.rel (%p12) target = $region8
    $region5: #{tpu_custom_call.1} parent=1 // loop_body
      %s16 = ssub.s32 %s11, 1
      %s17 = ssub.s32 %s11, 2
      %s18 = sadd.s32 %s11, 1
      %s20 = sadd.s32 %s19, 1
      %p23 = scmp.eq.s32.totalorder %s11, 1
      %p24 = scmp.ne.s32.totalorder %s19, %s21
      %p25 = scmp.eq.s32.totalorder %s11, 0
      %p26 = por %p24, %p25
      %p27 = scmp.ne.s32.totalorder %s19, %s21
      %p28 = scmp.eq.s32.totalorder %s16, 1
      %p29 = por %p27, %p28
      %p30 = scmp.ne.s32.totalorder %s21, %s22
      %p31 = scmp.eq.s32.totalorder %s16, 0
      %p32 = por %p30, %p31
      %p33 = scmp.ne.s32.totalorder %s21, %s22
      %p34 = scmp.eq.s32.totalorder %s17, 1
      %p35 = por %p33, %p34
      %p37 = scmp.ne.s32.totalorder %s22, %s36
      %p38 = scmp.eq.s32.totalorder %s17, 0
      %p39 = por %p37, %p38
      %s41 = sadd.s32 %s40, 1
      %p44 = scmp.eq.s32.totalorder %s11, 1
      %p45 = scmp.ne.s32.totalorder %s40, %s42
      %p46 = scmp.eq.s32.totalorder %s11, 0
      %p47 = por %p45, %p46
      %p48 = scmp.ne.s32.totalorder %s40, %s42
      %p49 = scmp.eq.s32.totalorder %s16, 1
      %p50 = por %p48, %p49
      %p51 = scmp.ne.s32.totalorder %s42, %s43
      %p52 = scmp.eq.s32.totalorder %s16, 0
      %p53 = por %p51, %p52
      %p54 = scmp.ne.s32.totalorder %s42, %s43
      %p55 = scmp.eq.s32.totalorder %s17, 1
      %p56 = por %p54, %p55
      %p58 = scmp.ne.s32.totalorder %s43, %s57
      %p59 = scmp.eq.s32.totalorder %s17, 0
      %p60 = por %p58, %p59
      %s61 = ssub.s32 %s11, %s18
      %p62 = scmp.eq.s32.totalorder %s61, 0
      %s64 = sadd.s32 %s63, 1
      %s65 = scalar_select %p62, %s63, %s64
      %p68 = pneg %p62
      %p69 = scmp.eq.s32.totalorder %s11, 1
      %p70 = por %p68, %p69
      %p71 = scmp.ne.s32.totalorder %s63, %s66
      %p72 = scmp.eq.s32.totalorder %s11, 0
      %p73 = por %p71, %p72
      %p74 = scmp.ne.s32.totalorder %s63, %s66
      %p75 = scmp.eq.s32.totalorder %s16, 1
      %p76 = por %p74, %p75
      %p77 = scmp.ne.s32.totalorder %s66, %s67
      %p78 = scmp.eq.s32.totalorder %s16, 0
      %p79 = por %p77, %p78
      %p80 = scmp.ne.s32.totalorder %s66, %s67
      %p81 = scmp.eq.s32.totalorder %s17, 1
      %p82 = por %p80, %p81
      %p84 = scmp.ne.s32.totalorder %s67, %s83
      %p85 = scmp.eq.s32.totalorder %s17, 0
      %p86 = por %p84, %p85
      %s87 = ssub.s32 %s11, %s18
      %p88 = scmp.eq.s32.totalorder %s87, 0
      %s90 = sadd.s32 %s89, 1
      %s91 = scalar_select %p88, %s89, %s90
      %p94 = pneg %p88
      %p95 = scmp.eq.s32.totalorder %s11, 1
      %p96 = por %p94, %p95
      %p97 = scmp.ne.s32.totalorder %s89, %s92
      %p98 = scmp.eq.s32.totalorder %s11, 0
      %p99 = por %p97, %p98
      %p100 = scmp.ne.s32.totalorder %s89, %s92
      %p101 = scmp.eq.s32.totalorder %s16, 1
      %p102 = por %p100, %p101
      %p103 = scmp.ne.s32.totalorder %s92, %s93
      %p104 = scmp.eq.s32.totalorder %s16, 0
      %p105 = por %p103, %p104
      %p106 = scmp.ne.s32.totalorder %s92, %s93
      %p107 = scmp.eq.s32.totalorder %s17, 1
      %p108 = por %p106, %p107
      %p110 = scmp.ne.s32.totalorder %s93, %s109
      %p111 = scmp.eq.s32.totalorder %s17, 0
      %p112 = por %p110, %p111
      %p113 = scmp.le.s32.totalorder 1, %s11
      %p114 = scmp.lt.s32.totalorder %s11, 3
      %p115 = pnand %p113, %p114
      %p116 = pneg %p115
      // Predicated region
      $region9: #{tpu_custom_call.1} parent=5 // pred_check
        _
      $region10: #{tpu_custom_call.1} parent=5 // pred_check_branch
        %118 = sbr.rel (%p115) target = $region12
      $region11: #{tpu_custom_call.1} parent=5 // pred_region
        %s119 = ssub.s32 %s11, 1
        // Predicated region
        $region13: #{tpu_custom_call.1} parent=11 // pred_check
          %p120 = pneg %p32
        $region14: #{tpu_custom_call.1} parent=11 // pred_check_branch
          %122 = sbr.rel (%p120) target = $region16
        $region15: #{tpu_custom_call.1} parent=11 // pred_region
          %s124 = ssub.s32 16, 16
          %125 = vsyncadd [#allocation3], %s124
          %s127 = sshll.u32 %s0, 4
          %s128 = int_to_ptr.vmem [resolvable:$true] %s127
          %130 = dma.vmem_to_smem %s128, 16, [#allocation2], [#allocation3]
        $region16: #{tpu_custom_call.1} parent=11 // pred_fallthru
          _
        // Predicated region
        $region17: #{tpu_custom_call.1} parent=11 // pred_check
          %p131 = pneg %p53
        $region18: #{tpu_custom_call.1} parent=11 // pred_check_branch
          %133 = sbr.rel (%p131) target = $region20
        $region19: #{tpu_custom_call.1} parent=11 // pred_region
          %s135 = ssub.s32 16, 16
          %136 = vsyncadd [#allocation5], %s135
          %s138 = sshll.u32 %s1, 4
          %s139 = int_to_ptr.vmem [resolvable:$true] %s138
          %141 = dma.vmem_to_smem %s139, 16, [#allocation4], [#allocation5]
        $region20: #{tpu_custom_call.1} parent=11 // pred_fallthru
          _
      $region12: #{tpu_custom_call.1} parent=5 // pred_fallthru
        _
      %p142 = scmp.lt.s32.totalorder %s11, 2
      // Predicated region
      $region21: #{tpu_custom_call.1} parent=5 // pred_check
        %p143 = pneg %p142
      $region22: #{tpu_custom_call.1} parent=5 // pred_check_branch
        %145 = sbr.rel (%p143) target = $region24
      $region23: #{tpu_custom_call.1} parent=5 // pred_region
        // Predicated region
        $region25: #{tpu_custom_call.1} parent=23 // pred_check
          %p146 = pneg %p73
        $region26: #{tpu_custom_call.1} parent=23 // pred_check_branch
          %148 = sbr.rel (%p146) target = $region28
        $region27: #{tpu_custom_call.1} parent=23 // pred_region
          %p149 = scmp.lt.s32.totalorder %s11, 1
          %s150 = scalar_select %p149, %s11, 1
          %s151 = smul.addr %s150, 2
          %s152 = smul.addr %s151, 4
          %s153 = scalar_lea.vmem %s2, %s152
        $region28: #{tpu_custom_call.1} parent=23 // pred_fallthru
          _
      $region24: #{tpu_custom_call.1} parent=5 // pred_fallthru
        _
      %p154 = scmp.le.s32.totalorder 1, %s11
      %p155 = scmp.lt.s32.totalorder %s11, 3
      %p156 = pnand %p154, %p155
      %p157 = pneg %p156
      // Predicated region
      $region29: #{tpu_custom_call.1} parent=5 // pred_check
        _
      $region30: #{tpu_custom_call.1} parent=5 // pred_check_branch
        %159 = sbr.rel (%p156) target = $region32
      $region31: #{tpu_custom_call.1} parent=5 // pred_region
        %s160 = ssub.s32 %s11, 1
        // Predicated region
        $region33: #{tpu_custom_call.1} parent=31 // pred_check
          %p161 = pneg %p32
        $region34: #{tpu_custom_call.1} parent=31 // pred_check_branch
          %163 = sbr.rel (%p161) target = $region36
        $region35: #{tpu_custom_call.1} parent=31 // pred_region
          %164 = dma.done [#allocation3], 16
        $region36: #{tpu_custom_call.1} parent=31 // pred_fallthru
          _
        // Predicated region
        $region37: #{tpu_custom_call.1} parent=31 // pred_check
          %p165 = pneg %p53
        $region38: #{tpu_custom_call.1} parent=31 // pred_check_branch
          %167 = sbr.rel (%p165) target = $region40
        $region39: #{tpu_custom_call.1} parent=31 // pred_region
          %168 = dma.done [#allocation5], 16
        $region40: #{tpu_custom_call.1} parent=31 // pred_fallthru
          _
        %169 = sfence
        %p170 = pneg %p32
        %p171 = pneg %p29
        %p172 = pneg %p53
        %p173 = pneg %p50
        %p174 = scmp.lt.s32.totalorder %s16, 1
        %s175 = scalar_select %p174, %s16, 1
        %s176 = smul.addr %s175, 2
        %s177 = smul.addr %s176, 4
        %s178 = scalar_lea.vmem %s2, %s177
        %p179 = pneg %p79
        %p180 = pneg %p76
        %p181 = pneg %p105
        %p182 = pneg %p102
        %p183 = scmp.lt.s32.totalorder %s16, 1
        %s184 = scalar_select %p183, %s16, 1
        %s185 = smul.addr %s184, 2
        %s186 = smul.addr %s185, 4
        %s187 = scalar_lea.vmem %s3, %s186
        %p188 = scmp.lt.s32.totalorder %s16, 1
        %s189 = scalar_select %p188, %s16, 1
        %s190 = smul.addr %s189, 2
        %s191 = smul.addr %s190, 4
        %s192 = scalar_lea.vmem %s2, %s191
        %p193 = scmp.lt.s32.totalorder %s16, 1
        %s194 = scalar_select %p193, %s16, 1
        %s195 = smul.addr %s194, 2
        %s196 = smul.addr %s195, 4
        %s197 = scalar_lea.vmem %s3, %s196
        %s198 = sld [smem:[#allocation2]]
        %s199 = sld [smem:[#allocation4]]
        %v200 = vld [vmem:[%s192] ss:$4 sm:$0x3]
        %v201 = vstv %s198
        %v202 = vmul.f32 %v200, %v201
        %v203 = vstv %s199
        %v204 = vadd.f32 %v202, %v203
        %v205 = vlaneseq
        %vm206 = vcmp.ge.s32.totalorder %v205, 0
        %vm207 = vcmp.lt.s32.totalorder %v205, 256
        %vm208 = vmand %vm206, %vm207
        %209 = vst.msk [vmem:[%s197] ss:$4 sm:$0x3] %vm208, %v204
        %s210 = sld [smem:[#allocation2 + $0x1]]
        %s211 = sld [smem:[#allocation4 + $0x1]]
        %s212 = scalar_lea.vmem %s192, 1
        %v213 = vld [vmem:[%s212] ss:$4 sm:$0x3]
        %v214 = vstv %s210
        %v215 = vmul.f32 %v213, %v214
        %v216 = vstv %s211
        %v217 = vadd.f32 %v215, %v216
        %s218 = scalar_lea.vmem %s197, 1
        %219 = vst.msk [vmem:[%s218] ss:$4 sm:$0x3] %vm208, %v217
        %s220 = sld [smem:[#allocation2 + $0x2]]
        %s221 = sld [smem:[#allocation4 + $0x2]]
        %s222 = scalar_lea.vmem %s192, 2
        %v223 = vld [vmem:[%s222] ss:$4 sm:$0x3]
        %v224 = vstv %s220
        %v225 = vmul.f32 %v223, %v224
        %v226 = vstv %s221
        %v227 = vadd.f32 %v225, %v226
        %s228 = scalar_lea.vmem %s197, 2
        %229 = vst.msk [vmem:[%s228] ss:$4 sm:$0x3] %vm208, %v227
        %p230 = scmp.lt.s32.totalorder %s16, 1
        %s231 = scalar_select %p230, %s16, 1
        %s232 = smul.addr %s231, 2
        %s233 = smul.addr %s232, 4
        %s234 = scalar_lea.vmem %s3, %s233
        // Predicated region
        $region41: #{tpu_custom_call.1} parent=31 // pred_check
          %p235 = pneg %p102
        $region42: #{tpu_custom_call.1} parent=31 // pred_check_branch
          %237 = sbr.rel (%p235) target = $region44
        $region43: #{tpu_custom_call.1} parent=31 // pred_region
          _
        $region44: #{tpu_custom_call.1} parent=31 // pred_fallthru
          _
      $region32: #{tpu_custom_call.1} parent=5 // pred_fallthru
        _
      %p238 = scmp.le.s32.totalorder 2, %s11
      // Predicated region
      $region45: #{tpu_custom_call.1} parent=5 // pred_check
        %p239 = pneg %p238
      $region46: #{tpu_custom_call.1} parent=5 // pred_check_branch
        %241 = sbr.rel (%p239) target = $region48
      $region47: #{tpu_custom_call.1} parent=5 // pred_region
        %s242 = ssub.s32 %s11, 2
        // Predicated region
        $region49: #{tpu_custom_call.1} parent=47 // pred_check
          %p243 = pneg %p108
        $region50: #{tpu_custom_call.1} parent=47 // pred_check_branch
          %245 = sbr.rel (%p243) target = $region52
        $region51: #{tpu_custom_call.1} parent=47 // pred_region
          %p246 = scmp.lt.s32.totalorder %s17, 1
          %s247 = scalar_select %p246, %s17, 1
          %s248 = smul.addr %s247, 2
          %s249 = smul.addr %s248, 4
          %s250 = scalar_lea.vmem %s3, %s249
        $region52: #{tpu_custom_call.1} parent=47 // pred_fallthru
          _
      $region48: #{tpu_custom_call.1} parent=5 // pred_fallthru
        _
    $region6: #{tpu_custom_call.1} parent=1 // loop_footer
      %s15 = sadd.s32 1, %s11
    $region7: #{tpu_custom_call.1} parent=1 // loop_footer_branch
      %10 = sbr.rel target = $region3
    $region8: #{tpu_custom_call.1} parent=1 // loop_exit
      _
    %251 = vsyncpa [#allocation3], 1
    %s252 = scalar_lea.sflag [#allocation3], 1
    %253 = vsyncpa %s252, 1
    %254 = vsyncpa [#allocation5], 1

</llo_original>
